<compile_context>
chip_gen: v7x
topology: tpu7x:2x2x1
jax: 0.10.0
libtpu: 0.0.40
codegen_flags: <defaults>
</compile_context>

<pallas_src>
import functools

import jax
import jax.numpy as jnp
from jax.experimental import pallas as pl
from jax.experimental.pallas import tpu as pltpu

NUM_ITERATIONS = 2


def _make_interaction_kernel(units, pack_width):
    def kernel(in_ref, w1_ref, b1_ref, w23_ref, b23_ref, w4_ref, b4_ref, out_ref):
        tile_b = in_ref.shape[0]

        # Unpack the lane-dense activation slab (x | hf | hb | pad).
        x0 = in_ref[:, 0 * units:1 * units]
        hf = in_ref[:, 1 * units:2 * units]
        hb = in_ref[:, 2 * units:3 * units]

        # Hoist weights / biases (and bias broadcasts) out of the unrolled loop:
        # JAX does not CSE broadcast_in_dim, and re-loading per iteration adds
        # redundant vld traffic on the serial critical chain.
        w1 = w1_ref[...]
        w23 = w23_ref[...]
        w4 = w4_ref[...]
        b1 = jnp.broadcast_to(b1_ref[...], (tile_b, units))
        b23 = jnp.broadcast_to(b23_ref[...], (tile_b, 2 * units))
        b4 = jnp.broadcast_to(b4_ref[...], (tile_b, units))

        # Fixed tiny trip count -> fully unrolled Python loop (LLO-visible).
        for _ in range(NUM_ITERATIONS):
            x1 = jax.nn.sigmoid(
                jnp.dot(x0 + hf, w1, preferred_element_type=jnp.float32) + b1)
            # dense2 / dense3 are independent given x1: one block-diagonal
            # matmul replaces two fully serialized MXU pushes.
            z23 = jnp.concatenate([hb + x1, x1 + hf], axis=-1)
            y23 = jax.nn.sigmoid(
                jnp.dot(z23, w23, preferred_element_type=jnp.float32) + b23)
            hb2 = y23[:, :units]
            hf2 = y23[:, units:]
            x2 = jax.nn.sigmoid(
                jnp.dot(hb2 + x1, w4, preferred_element_type=jnp.float32) + b4)
            x0, hf, hb = x2, hf2, hb2

        # Single lane-dense [tile_b, pack_width] unmasked store (x | hf | hb | 0)
        # instead of three masked 32-lane stores.
        pad = jnp.zeros((tile_b, pack_width - 3 * units), dtype=out_ref.dtype)
        out_ref[...] = jnp.concatenate([x0, hf, hb, pad], axis=-1)

    return kernel


def _pick_tile_b(batch):
    # Shard larger batches across v7x's two TensorCores and keep per-step VMEM
    # bounded; a single tile for tiny problems. Only divisors of batch are
    # chosen so there is never a ragged (masked) last tile.
    for cand in (512, 256, 128):
        if batch > cand and batch % cand == 0:
            return cand
    return batch


@functools.partial(jax.jit, static_argnames=("tile_b",))
def interaction_forward(inputs, hf, hb, params, *, tile_b=None):
    """params = ((w1,b1),(w2,b2),(w3,b3),(w4,b4)); w: [units, units] (in, out); b: [1, units]."""
    batch, units = inputs.shape
    if tile_b is None:
        tile_b = _pick_tile_b(batch)
    f32 = jnp.float32
    pack_width = 128 * pl.cdiv(3 * units, 128)  # lane-dense slab width (>=128)

    # Pack the three activations into one lane-dense slab: x | hf | hb | pad.
    slab = jnp.concatenate(
        [inputs, hf, hb, jnp.zeros((batch, pack_width - 3 * units), f32)],
        axis=-1)

    (w1, b1), (w2, b2), (w3, b3), (w4, b4) = params
    # Block-diagonal packing of dense2 / dense3 (done once, outside the kernel).
    # TODO(synk): if this module is applied many times with the same params,
    # hoist this packing (and the slab packing of persistent hf/hb state) to a
    # one-time prepare step so it is not re-emitted per call.
    w23 = jnp.zeros((2 * units, 2 * units), f32)
    w23 = w23.at[:units, :units].set(w2)
    w23 = w23.at[units:, units:].set(w3)
    b23 = jnp.concatenate([b2, b3], axis=-1)

    num_tiles = pl.cdiv(batch, tile_b)

    flops = NUM_ITERATIONS * batch * (2 * units * units                # dense1
                                      + 2 * (2 * units) * (2 * units)  # fused 2/3
                                      + 2 * units * units)             # dense4
    transcendentals = NUM_ITERATIONS * 4 * batch * units
    bytes_accessed = 4 * (2 * batch * pack_width + 6 * units * units + 4 * units)

    kernel = _make_interaction_kernel(units, pack_width)

    def weight_spec(shape):
        return pl.BlockSpec(shape, lambda i: (0, 0))  # resident across batch tiles

    packed_out = pl.pallas_call(
        kernel,
        out_shape=jax.ShapeDtypeStruct((batch, pack_width), f32),
        grid=(num_tiles,),
        in_specs=[
            pl.BlockSpec((tile_b, pack_width), lambda i: (i, 0)),  # activation slab
            weight_spec((units, units)),           # w1
            weight_spec((1, units)),               # b1
            weight_spec((2 * units, 2 * units)),   # w23 (block-diag of w2, w3)
            weight_spec((1, 2 * units)),           # b23
            weight_spec((units, units)),           # w4
            weight_spec((1, units)),               # b4
        ],
        out_specs=pl.BlockSpec((tile_b, pack_width), lambda i: (i, 0)),
        # Output slab reuses the input slab's HBM buffer (pure overwrite).
        input_output_aliases={0: 0},
        compiler_params=pltpu.CompilerParams(
            dimension_semantics=("parallel",)),     # shards batch tiles on v7x's 2 TCs
        cost_estimate=pl.CostEstimate(
            flops=flops,
            transcendentals=transcendentals,
            bytes_accessed=bytes_accessed),
    )(slab, w1, b1, w23, b23, w4, b4)

    x_out = packed_out[:, 0 * units:1 * units]
    hf_out = packed_out[:, 1 * units:2 * units]
    hb_out = packed_out[:, 2 * units:3 * units]
    return x_out, hf_out, hb_out


def interaction_reference(inputs, hf, hb, params):
    x0, hf_, hb_ = inputs, hf, hb
    for _ in range(NUM_ITERATIONS):
        x1 = jax.nn.sigmoid((x0 + hf_) @ params[0][0] + params[0][1])
        hb2 = jax.nn.sigmoid((hb_ + x1) @ params[1][0] + params[1][1])
        hf2 = jax.nn.sigmoid((x1 + hf_) @ params[2][0] + params[2][1])
        x2 = jax.nn.sigmoid((hb2 + x1) @ params[3][0] + params[3][1])
        x0, hf_, hb_ = x2, hf2, hb2
    return x0, hf_, hb_


if __name__ == "__main__":
    batch = 8
    units = 32

    key = jax.random.PRNGKey(0)
    keys = jax.random.split(key, 11)

    inputs = jax.random.normal(keys[0], (batch, units), dtype=jnp.float32)
    hf = jax.random.normal(keys[1], (batch, units), dtype=jnp.float32)
    hb = jax.random.normal(keys[2], (batch, units), dtype=jnp.float32)

    # Deterministic parameter init (uniform, roughly PyTorch Linear default scale).
    bound = 1.0 / (units ** 0.5)
    params = []
    for i in range(4):
        w = jax.random.uniform(keys[3 + 2 * i], (units, units),
                               minval=-bound, maxval=bound, dtype=jnp.float32)
        b = jax.random.uniform(keys[4 + 2 * i], (1, units),
                               minval=-bound, maxval=bound, dtype=jnp.float32)
        params.append((w, b))
    params = tuple(params)

    x_out, hf_out, hb_out = interaction_forward(inputs, hf, hb, params)
    jax.block_until_ready((x_out, hf_out, hb_out))

    x_ref, hf_ref, hb_ref = interaction_reference(inputs, hf, hb, params)
    assert jnp.allclose(x_out, x_ref, atol=1e-5), "x mismatch"
    assert jnp.allclose(hf_out, hf_ref, atol=1e-5), "hf mismatch"
    assert jnp.allclose(hb_out, hb_ref, atol=1e-5), "hb mismatch"

    print("KERNEL_OK")
</pallas_src>

<mosaic_0001>
module attributes {stable_mosaic.version = 11 : i64} {
  func.func @kernel(%arg0: i32, %arg1: memref<8x128xf32, #tpu.memory_space<vmem>>, %arg2: memref<32x32xf32, #tpu.memory_space<vmem>>, %arg3: memref<1x32xf32, #tpu.memory_space<vmem>>, %arg4: memref<64x64xf32, #tpu.memory_space<vmem>>, %arg5: memref<1x64xf32, #tpu.memory_space<vmem>>, %arg6: memref<32x32xf32, #tpu.memory_space<vmem>>, %arg7: memref<1x32xf32, #tpu.memory_space<vmem>>, %arg8: memref<8x128xf32, #tpu.memory_space<vmem>>) attributes {dimension_semantics = [#tpu.dimension_semantics<parallel>], iteration_bounds = array<i64: 1>, scalar_prefetch = 0 : i64, scratch_operands = 0 : i64, tpu.core_type = #tpu.core_type<tc>, window_params = [{transform_indices = @transform_0, window_bounds = array<i64: 8, 128>}, {pipeline_mode = #tpu.pipeline_mode<synchronous>, transform_indices = @transform_1, window_bounds = array<i64: 32, 32>}, {pipeline_mode = #tpu.pipeline_mode<synchronous>, transform_indices = @transform_2, window_bounds = array<i64: 1, 32>}, {pipeline_mode = #tpu.pipeline_mode<synchronous>, transform_indices = @transform_3, window_bounds = array<i64: 64, 64>}, {pipeline_mode = #tpu.pipeline_mode<synchronous>, transform_indices = @transform_4, window_bounds = array<i64: 1, 64>}, {pipeline_mode = #tpu.pipeline_mode<synchronous>, transform_indices = @transform_5, window_bounds = array<i64: 32, 32>}, {pipeline_mode = #tpu.pipeline_mode<synchronous>, transform_indices = @transform_6, window_bounds = array<i64: 1, 32>}, {transform_indices = @transform_7, window_bounds = array<i64: 8, 128>}]} {
    %c0 = arith.constant 0 : index
    %c0_0 = arith.constant 0 : index
    %0 = vector.load %arg1[%c0, %c0_0] : memref<8x128xf32, #tpu.memory_space<vmem>>, vector<8x32xf32>
    %c0_1 = arith.constant 0 : index
    %c32 = arith.constant 32 : index
    %1 = vector.load %arg1[%c0_1, %c32] : memref<8x128xf32, #tpu.memory_space<vmem>>, vector<8x32xf32>
    %c0_2 = arith.constant 0 : index
    %c64 = arith.constant 64 : index
    %2 = vector.load %arg1[%c0_2, %c64] : memref<8x128xf32, #tpu.memory_space<vmem>>, vector<8x32xf32>
    %c0_3 = arith.constant 0 : index
    %c0_4 = arith.constant 0 : index
    %3 = vector.load %arg2[%c0_3, %c0_4] : memref<32x32xf32, #tpu.memory_space<vmem>>, vector<32x32xf32>
    %c0_5 = arith.constant 0 : index
    %c0_6 = arith.constant 0 : index
    %4 = vector.load %arg4[%c0_5, %c0_6] : memref<64x64xf32, #tpu.memory_space<vmem>>, vector<64x64xf32>
    %c0_7 = arith.constant 0 : index
    %c0_8 = arith.constant 0 : index
    %5 = vector.load %arg6[%c0_7, %c0_8] : memref<32x32xf32, #tpu.memory_space<vmem>>, vector<32x32xf32>
    %c0_9 = arith.constant 0 : index
    %c0_10 = arith.constant 0 : index
    %6 = vector.load %arg3[%c0_9, %c0_10] : memref<1x32xf32, #tpu.memory_space<vmem>>, vector<1x32xf32>
    %7 = vector.shape_cast %6 : vector<1x32xf32> to vector<1x32xf32>
    %8 = vector.broadcast %7 : vector<1x32xf32> to vector<8x32xf32>
    %c0_11 = arith.constant 0 : index
    %c0_12 = arith.constant 0 : index
    %9 = vector.load %arg5[%c0_11, %c0_12] : memref<1x64xf32, #tpu.memory_space<vmem>>, vector<1x64xf32>
    %10 = vector.shape_cast %9 : vector<1x64xf32> to vector<1x64xf32>
    %11 = vector.broadcast %10 : vector<1x64xf32> to vector<8x64xf32>
    %c0_13 = arith.constant 0 : index
    %c0_14 = arith.constant 0 : index
    %12 = vector.load %arg7[%c0_13, %c0_14] : memref<1x32xf32, #tpu.memory_space<vmem>>, vector<1x32xf32>
    %13 = vector.shape_cast %12 : vector<1x32xf32> to vector<1x32xf32>
    %14 = vector.broadcast %13 : vector<1x32xf32> to vector<8x32xf32>
    %15 = arith.addf %0, %1 : vector<8x32xf32>
    %cst = arith.constant dense<0.000000e+00> : vector<8x32xf32>
    %16 = tpu.matmul %15, %3, %cst {dimension_numbers = #tpu.dot_dimension_numbers<[1], [0], [0], [1], [0, 0, 1, 1], [], []>} : vector<8x32xf32>, vector<32x32xf32>, vector<8x32xf32> -> vector<8x32xf32>
    %17 = arith.addf %16, %8 : vector<8x32xf32>
    %18 = arith.negf %17 : vector<8x32xf32>
    %19 = math.exp %18 : vector<8x32xf32>
    %cst_15 = arith.constant 1.000000e+00 : f32
    %20 = vector.broadcast %cst_15 : f32 to vector<8x32xf32>
    %21 = arith.addf %20, %19 : vector<8x32xf32>
    %22 = arith.divf %20, %21 : vector<8x32xf32>
    %23 = arith.addf %2, %22 : vector<8x32xf32>
    %24 = arith.addf %22, %1 : vector<8x32xf32>
    %25 = tpu.concatenate %23, %24 in 1 : vector<8x32xf32>, vector<8x32xf32> -> vector<8x64xf32>
    %cst_16 = arith.constant dense<0.000000e+00> : vector<8x64xf32>
    %26 = tpu.matmul %25, %4, %cst_16 {dimension_numbers = #tpu.dot_dimension_numbers<[1], [0], [0], [1], [0, 0, 1, 1], [], []>} : vector<8x64xf32>, vector<64x64xf32>, vector<8x64xf32> -> vector<8x64xf32>
    %27 = arith.addf %26, %11 : vector<8x64xf32>
    %28 = arith.negf %27 : vector<8x64xf32>
    %29 = math.exp %28 : vector<8x64xf32>
    %cst_17 = arith.constant 1.000000e+00 : f32
    %30 = vector.broadcast %cst_17 : f32 to vector<8x64xf32>
    %31 = arith.addf %30, %29 : vector<8x64xf32>
    %32 = arith.divf %30, %31 : vector<8x64xf32>
    %33 = vector.extract_strided_slice %32 {offsets = [0, 0], sizes = [8, 32], strides = [1, 1]} : vector<8x64xf32> to vector<8x32xf32>
    %34 = vector.extract_strided_slice %32 {offsets = [0, 32], sizes = [8, 32], strides = [1, 1]} : vector<8x64xf32> to vector<8x32xf32>
    %35 = arith.addf %33, %22 : vector<8x32xf32>
    %cst_18 = arith.constant dense<0.000000e+00> : vector<8x32xf32>
    %36 = tpu.matmul %35, %5, %cst_18 {dimension_numbers = #tpu.dot_dimension_numbers<[1], [0], [0], [1], [0, 0, 1, 1], [], []>} : vector<8x32xf32>, vector<32x32xf32>, vector<8x32xf32> -> vector<8x32xf32>
    %37 = arith.addf %36, %14 : vector<8x32xf32>
    %38 = arith.negf %37 : vector<8x32xf32>
    %39 = math.exp %38 : vector<8x32xf32>
    %cst_19 = arith.constant 1.000000e+00 : f32
    %40 = vector.broadcast %cst_19 : f32 to vector<8x32xf32>
    %41 = arith.addf %40, %39 : vector<8x32xf32>
    %42 = arith.divf %40, %41 : vector<8x32xf32>
    %43 = arith.addf %42, %34 : vector<8x32xf32>
    %cst_20 = arith.constant dense<0.000000e+00> : vector<8x32xf32>
    %44 = tpu.matmul %43, %3, %cst_20 {dimension_numbers = #tpu.dot_dimension_numbers<[1], [0], [0], [1], [0, 0, 1, 1], [], []>} : vector<8x32xf32>, vector<32x32xf32>, vector<8x32xf32> -> vector<8x32xf32>
    %45 = arith.addf %44, %8 : vector<8x32xf32>
    %46 = arith.negf %45 : vector<8x32xf32>
    %47 = math.exp %46 : vector<8x32xf32>
    %cst_21 = arith.constant 1.000000e+00 : f32
    %48 = vector.broadcast %cst_21 : f32 to vector<8x32xf32>
    %49 = arith.addf %48, %47 : vector<8x32xf32>
    %50 = arith.divf %48, %49 : vector<8x32xf32>
    %51 = arith.addf %33, %50 : vector<8x32xf32>
    %52 = arith.addf %50, %34 : vector<8x32xf32>
    %53 = tpu.concatenate %51, %52 in 1 : vector<8x32xf32>, vector<8x32xf32> -> vector<8x64xf32>
    %cst_22 = arith.constant dense<0.000000e+00> : vector<8x64xf32>
    %54 = tpu.matmul %53, %4, %cst_22 {dimension_numbers = #tpu.dot_dimension_numbers<[1], [0], [0], [1], [0, 0, 1, 1], [], []>} : vector<8x64xf32>, vector<64x64xf32>, vector<8x64xf32> -> vector<8x64xf32>
    %55 = arith.addf %54, %11 : vector<8x64xf32>
    %56 = arith.negf %55 : vector<8x64xf32>
    %57 = math.exp %56 : vector<8x64xf32>
    %cst_23 = arith.constant 1.000000e+00 : f32
    %58 = vector.broadcast %cst_23 : f32 to vector<8x64xf32>
    %59 = arith.addf %58, %57 : vector<8x64xf32>
    %60 = arith.divf %58, %59 : vector<8x64xf32>
    %61 = vector.extract_strided_slice %60 {offsets = [0, 0], sizes = [8, 32], strides = [1, 1]} : vector<8x64xf32> to vector<8x32xf32>
    %62 = vector.extract_strided_slice %60 {offsets = [0, 32], sizes = [8, 32], strides = [1, 1]} : vector<8x64xf32> to vector<8x32xf32>
    %63 = arith.addf %61, %50 : vector<8x32xf32>
    %cst_24 = arith.constant dense<0.000000e+00> : vector<8x32xf32>
    %64 = tpu.matmul %63, %5, %cst_24 {dimension_numbers = #tpu.dot_dimension_numbers<[1], [0], [0], [1], [0, 0, 1, 1], [], []>} : vector<8x32xf32>, vector<32x32xf32>, vector<8x32xf32> -> vector<8x32xf32>
    %65 = arith.addf %64, %14 : vector<8x32xf32>
    %66 = arith.negf %65 : vector<8x32xf32>
    %67 = math.exp %66 : vector<8x32xf32>
    %cst_25 = arith.constant 1.000000e+00 : f32
    %68 = vector.broadcast %cst_25 : f32 to vector<8x32xf32>
    %69 = arith.addf %68, %67 : vector<8x32xf32>
    %70 = arith.divf %68, %69 : vector<8x32xf32>
    %cst_26 = arith.constant 0.000000e+00 : f32
    %71 = vector.broadcast %cst_26 : f32 to vector<8x32xf32>
    %72 = tpu.concatenate %70, %62, %61, %71 in 1 : vector<8x32xf32>, vector<8x32xf32>, vector<8x32xf32>, vector<8x32xf32> -> vector<8x128xf32>
    %c0_27 = arith.constant 0 : index
    %c0_28 = arith.constant 0 : index
    %73 = vector.load %arg8[%c0_27, %c0_28] : memref<8x128xf32, #tpu.memory_space<vmem>>, vector<8x128xf32>
    tpu.vector_store %arg8[%c0_27, %c0_28], %72 {strides = array<i32>} : memref<8x128xf32, #tpu.memory_space<vmem>>, vector<8x128xf32>,
    return
  }
  func.func @transform_0(%arg0: i32) -> (i32, i32) {
    %c0_i32 = arith.constant 0 : i32
    %c0_i32_0 = arith.constant 0 : i32
    return %arg0, %c0_i32 : i32, i32
  }
  func.func @transform_1(%arg0: i32) -> (i32, i32) {
    %c0_i32 = arith.constant 0 : i32
    %c0_i32_0 = arith.constant 0 : i32
    %c0_i32_1 = arith.constant 0 : i32
    return %c0_i32, %c0_i32_0 : i32, i32
  }
  func.func @transform_2(%arg0: i32) -> (i32, i32) {
    %c0_i32 = arith.constant 0 : i32
    %c0_i32_0 = arith.constant 0 : i32
    %c0_i32_1 = arith.constant 0 : i32
    return %c0_i32, %c0_i32_0 : i32, i32
  }
  func.func @transform_3(%arg0: i32) -> (i32, i32) {
    %c0_i32 = arith.constant 0 : i32
    %c0_i32_0 = arith.constant 0 : i32
    %c0_i32_1 = arith.constant 0 : i32
    return %c0_i32, %c0_i32_0 : i32, i32
  }
  func.func @transform_4(%arg0: i32) -> (i32, i32) {
    %c0_i32 = arith.constant 0 : i32
    %c0_i32_0 = arith.constant 0 : i32
    %c0_i32_1 = arith.constant 0 : i32
    return %c0_i32, %c0_i32_0 : i32, i32
  }
  func.func @transform_5(%arg0: i32) -> (i32, i32) {
    %c0_i32 = arith.constant 0 : i32
    %c0_i32_0 = arith.constant 0 : i32
    %c0_i32_1 = arith.constant 0 : i32
    return %c0_i32, %c0_i32_0 : i32, i32
  }
  func.func @transform_6(%arg0: i32) -> (i32, i32) {
    %c0_i32 = arith.constant 0 : i32
    %c0_i32_0 = arith.constant 0 : i32
    %c0_i32_1 = arith.constant 0 : i32
    return %c0_i32, %c0_i32_0 : i32, i32
  }
  func.func @transform_7(%arg0: i32) -> (i32, i32) {
    %c0_i32 = arith.constant 0 : i32
    %c0_i32_0 = arith.constant 0 : i32
    return %arg0, %c0_i32 : i32, i32
  }
}

</mosaic_0001>

<llo_original>
// kernel: interaction_forward.1
$region0: #{interaction_forward.1}
  #allocation0 [shape = 'u32[]', space=smem, size = 0x4, offset = 0x4, fixed_abs, tag = 'smem constant byte address 0x4 - core index']
  #allocation1 [shape = 'u32[144,128]{1,0:T(1,128)}', space=vmem, size = 0x12000, scoped, tag = 'internal scratch']
  %s0 = inlined_call_operand.vmem [shape: f32[8,128], index: 0, kind: input, shape index: {}, may-alias: {0,7}]
  %s1 = inlined_call_operand.vmem [shape: f32[32,32], index: 1, kind: input, shape index: {}]
  %s2 = inlined_call_operand.vmem [shape: f32[1,32], index: 2, kind: input, shape index: {}]
  %s3 = inlined_call_operand.vmem [shape: f32[64,64], index: 3, kind: input, shape index: {}]
  %s4 = inlined_call_operand.vmem [shape: f32[1,64], index: 4, kind: input, shape index: {}]
  %s5 = inlined_call_operand.vmem [shape: f32[32,32], index: 5, kind: input, shape index: {}]
  %s6 = inlined_call_operand.vmem [shape: f32[1,32], index: 6, kind: input, shape index: {}]
  %s7 = inlined_call_operand.vmem [shape: f32[8,128], index: 7, kind: output, shape index: {}, may-alias: {0,7}]
  %s8 = sld [smem:[#allocation0]]
  $region38: #{interaction_forward.1} parent=0
    _
  %s10 = ssub.s32 1, %s8
  %s11 = scalar_select 0, %s10, %s8
  // Predicated region
  $region2: #{interaction_forward.1} parent=0 // pred_check
    _
  $region3: #{interaction_forward.1} parent=0 // pred_check_branch
    %13 = sbr.rel (0) target = $region5
  $region4: #{interaction_forward.1} parent=0 // pred_region
    _
  $region5: #{interaction_forward.1} parent=0 // pred_fallthru
    _
  // Predicated region
  $region6: #{interaction_forward.1} parent=0 // pred_check
    _
  $region7: #{interaction_forward.1} parent=0 // pred_check_branch
    %15 = sbr.rel (0) target = $region9
  $region8: #{interaction_forward.1} parent=0 // pred_region
    _
  $region9: #{interaction_forward.1} parent=0 // pred_fallthru
    _
  // Predicated region
  $region10: #{interaction_forward.1} parent=0 // pred_check
    _
  $region11: #{interaction_forward.1} parent=0 // pred_check_branch
    %17 = sbr.rel (0) target = $region13
  $region12: #{interaction_forward.1} parent=0 // pred_region
    _
  $region13: #{interaction_forward.1} parent=0 // pred_fallthru
    _
  // Predicated region
  $region14: #{interaction_forward.1} parent=0 // pred_check
    _
  $region15: #{interaction_forward.1} parent=0 // pred_check_branch
    %19 = sbr.rel (0) target = $region17
  $region16: #{interaction_forward.1} parent=0 // pred_region
    _
  $region17: #{interaction_forward.1} parent=0 // pred_fallthru
    _
  // Predicated region
  $region18: #{interaction_forward.1} parent=0 // pred_check
    _
  $region19: #{interaction_forward.1} parent=0 // pred_check_branch
    %21 = sbr.rel (0) target = $region21
  $region20: #{interaction_forward.1} parent=0 // pred_region
    _
  $region21: #{interaction_forward.1} parent=0 // pred_fallthru
    _
  // Predicated region
  $region22: #{interaction_forward.1} parent=0 // pred_check
    _
  $region23: #{interaction_forward.1} parent=0 // pred_check_branch
    %23 = sbr.rel (0) target = $region25
  $region24: #{interaction_forward.1} parent=0 // pred_region
    _
  $region25: #{interaction_forward.1} parent=0 // pred_fallthru
    _
  // Predicated region
  $region26: #{interaction_forward.1} parent=0 // pred_check
    _
  $region27: #{interaction_forward.1} parent=0 // pred_check_branch
    %25 = sbr.rel (0) target = $region29
  $region28: #{interaction_forward.1} parent=0 // pred_region
    _
  $region29: #{interaction_forward.1} parent=0 // pred_fallthru
    _
  %v26 = vld [vmem:[%s0] sm:$0xff]
  %v27 = vld [vmem:[%s1] sm:$0xff]
  %v28 = vld [vmem:[%s1 + $0x8] sm:$0xff]
  %v29 = vld [vmem:[%s1 + $0x10] sm:$0xff]
  %v30 = vld [vmem:[%s1 + $0x18] sm:$0xff]
  %v31 = vld [vmem:[%s3] sm:$0xff]
  %v32 = vld [vmem:[%s3 + $0x8] sm:$0xff]
  %v33 = vld [vmem:[%s3 + $0x10] sm:$0xff]
  %v34 = vld [vmem:[%s3 + $0x18] sm:$0xff]
  %v35 = vld [vmem:[%s3 + $0x20] sm:$0xff]
  %v36 = vld [vmem:[%s3 + $0x28] sm:$0xff]
  %v37 = vld [vmem:[%s3 + $0x30] sm:$0xff]
  %v38 = vld [vmem:[%s3 + $0x38] sm:$0xff]
  %v39 = vld [vmem:[%s5] sm:$0xff]
  %v40 = vld [vmem:[%s5 + $0x8] sm:$0xff]
  %v41 = vld [vmem:[%s5 + $0x10] sm:$0xff]
  %v42 = vld [vmem:[%s5 + $0x18] sm:$0xff]
  %v43 = vld [vmem:[%s2] sm:$0x1]
  %v45 = vlaneseq
  %v46 = vshrl.u32 %v45, 7
  %v47 = vsub.s32 0, %v46
  %v48 = vrot.slane %v43, %v47
  %v50 = vld [vmem:[%s4] sm:$0x1]
  %v52 = vlaneseq
  %v53 = vshrl.u32 %v52, 7
  %v54 = vsub.s32 0, %v53
  %v55 = vrot.slane %v50, %v54
  %v57 = vld [vmem:[%s6] sm:$0x1]
  %v59 = vlaneseq
  %v60 = vshrl.u32 %v59, 7
  %v61 = vsub.s32 0, %v60
  %v62 = vrot.slane %v57, %v61
  %65 = vrot.lane.b32.xlu0 %v26, 96
  %v66 = vpop.permute.xlu0 %65
  %v68 = vadd.f32 %v26, %v66
  %vm69 = vcmask 261120
  %v71 = vsel %vm69, %v68, 0
  %73 = vmatprep.subr.mxu0 0.0
  %74 = vmatpush1.msra.mxu0 %v27
  %75 = vmatprep.subr.mxu0 0.0
  %76 = vmatpush1.msra.mxu0 %v28
  %77 = vmatprep.subr.mxu0 0.0
  %78 = vmatpush1.msra.mxu0 %v29
  %79 = vmatprep.subr.mxu0 0.0
  %80 = vmatpush1.msra.mxu0 %v30
  %81 = vmatprep.subr.mxu0 0.0
  %82 = vmatpush1.msra.mxu0 0.0
  %83 = vmatprep.subr.mxu0 0.0
  %84 = vmatpush1.msra.mxu0 0.0
  %85 = vmatprep.subr.mxu0 0.0
  %86 = vmatpush1.msra.mxu0 0.0
  %87 = vmatprep.subr.mxu0 0.0
  %88 = vmatpush1.msra.mxu0 0.0
  %89 = vmatprep.subr.mxu0 0.0
  %90 = vmatpush1.msra.mxu0 0.0
  %91 = vmatprep.subr.mxu0 0.0
  %92 = vmatpush1.msra.mxu0 0.0
  %93 = vmatprep.subr.mxu0 0.0
  %94 = vmatpush1.msra.mxu0 0.0
  %95 = vmatprep.subr.mxu0 0.0
  %96 = vmatpush1.msra.mxu0 0.0
  %97 = vmatprep.subr.mxu0 0.0
  %98 = vmatpush1.msra.mxu0 0.0
  %99 = vmatprep.subr.mxu0 0.0
  %100 = vmatpush1.msra.mxu0 0.0
  %101 = vmatprep.subr.mxu0 0.0
  %102 = vmatpush1.msra.mxu0 0.0
  %103 = vmatprep.subr.mxu0 0.0
  %104 = vmatpush1.msra.mxu0 0.0
  %105 = vmatprep.subr.mxu0 0.0
  %106 = vmatpush1.msra.mxu0 0.0
  %107 = vmatprep.subr.mxu0 0.0
  %108 = vmatpush1.msra.mxu0 0.0
  %109 = vmatprep.subr.mxu0 0.0
  %110 = vmatpush1.msra.mxu0 0.0
  %111 = vmatprep.subr.mxu0 0.0
  %112 = vmatpush1.msra.mxu0 0.0
  %113 = vmatprep.subr.mxu0 0.0
  %114 = vmatpush1.msra.mxu0 0.0
  %115 = vmatprep.subr.mxu0 0.0
  %116 = vmatpush1.msra.mxu0 0.0
  %117 = vmatprep.subr.mxu0 0.0
  %118 = vmatpush1.msra.mxu0 0.0
  %119 = vmatprep.subr.mxu0 0.0
  %120 = vmatpush1.msra.mxu0 0.0
  %121 = vmatprep.subr.mxu0 0.0
  %122 = vmatpush1.msra.mxu0 0.0
  %123 = vmatprep.subr.mxu0 0.0
  %124 = vmatpush1.msra.mxu0 0.0
  %125 = vmatprep.subr.mxu0 0.0
  %126 = vmatpush1.msra.mxu0 0.0
  %127 = vmatprep.subr.mxu0 0.0
  %128 = vmatpush1.msra.mxu0 0.0
  %129 = vmatprep.subr.mxu0 0.0
  %130 = vmatpush1.msra.mxu0 0.0
  %131 = vmatprep.subr.mxu0 0.0
  %132 = vmatpush1.msra.mxu0 0.0
  %133 = vmatprep.subr.mxu0 0.0
  %134 = vmatpush1.msra.mxu0 0.0
  %135 = vmatprep.subr.mxu0 0.0
  %136 = vmatpush1.msra.mxu0 0.0
  %137 = vmatprep.mubr.f32.mxu0 0.0
  %138 = vmatmul.mubr.f32.gmra.mrb[0].mxu0 %v71
  %v139 = vpop.f32.mrb[0].mxu0
  %v140 = vadd.f32 %v48, %v139
  %v141 = vpop.f32.mrb[0].mxu0
  %142 = vdwg.mxu0
  %v143 = vxor.u32 %v140, 2147483648
  %v144 = vmul.f32 %v143, 1.442695
  %v145 = vpow.pop %v144
  %v146 = vadd.f32 %v145, 1.0
  %v147 = vrcp.pop %v146
  %v148 = vmul.f32 1.0, %v147
  %150 = vrot.lane.b32.xlu0 %v148, 64
  %v151 = vpop.permute.xlu0 %150
  %v153 = vadd.f32 %v26, %v151
  %v154 = vadd.f32 %v148, %v66
  %156 = vrot.lane.b32.xlu0 %v153, 64
  %v157 = vpop.permute.xlu0 %156
  %160 = vrot.lane.b32.xlu0 %v154, 32
  %v161 = vpop.permute.xlu0 %160
  %v163 = vsel %vm69, %v157, %v161
  %vm164 = vcmask 523264
  %v166 = vsel %vm164, %v163, 0
  %168 = vmatprep.subr.mxu0 0.0
  %169 = vmatpush1.msra.mxu0 %v31
  %170 = vmatprep.subr.mxu0 0.0
  %171 = vmatpush1.msra.mxu0 %v32
  %172 = vmatprep.subr.mxu0 0.0
  %173 = vmatpush1.msra.mxu0 %v33
  %174 = vmatprep.subr.mxu0 0.0
  %175 = vmatpush1.msra.mxu0 %v34
  %176 = vmatprep.subr.mxu0 0.0
  %177 = vmatpush1.msra.mxu0 %v35
  %178 = vmatprep.subr.mxu0 0.0
  %179 = vmatpush1.msra.mxu0 %v36
  %180 = vmatprep.subr.mxu0 0.0
  %181 = vmatpush1.msra.mxu0 %v37
  %182 = vmatprep.subr.mxu0 0.0
  %183 = vmatpush1.msra.mxu0 %v38
  %184 = vmatprep.subr.mxu0 0.0
  %185 = vmatpush1.msra.mxu0 0.0
  %186 = vmatprep.subr.mxu0 0.0
  %187 = vmatpush1.msra.mxu0 0.0
  %188 = vmatprep.subr.mxu0 0.0
  %189 = vmatpush1.msra.mxu0 0.0
  %190 = vmatprep.subr.mxu0 0.0
  %191 = vmatpush1.msra.mxu0 0.0
  %192 = vmatprep.subr.mxu0 0.0
  %193 = vmatpush1.msra.mxu0 0.0
  %194 = vmatprep.subr.mxu0 0.0
  %195 = vmatpush1.msra.mxu0 0.0
  %196 = vmatprep.subr.mxu0 0.0
  %197 = vmatpush1.msra.mxu0 0.0
  %198 = vmatprep.subr.mxu0 0.0
  %199 = vmatpush1.msra.mxu0 0.0
  %200 = vmatprep.subr.mxu0 0.0
  %201 = vmatpush1.msra.mxu0 0.0
  %202 = vmatprep.subr.mxu0 0.0
  %203 = vmatpush1.msra.mxu0 0.0
  %204 = vmatprep.subr.mxu0 0.0
  %205 = vmatpush1.msra.mxu0 0.0
  %206 = vmatprep.subr.mxu0 0.0
  %207 = vmatpush1.msra.mxu0 0.0
  %208 = vmatprep.subr.mxu0 0.0
  %209 = vmatpush1.msra.mxu0 0.0
  %210 = vmatprep.subr.mxu0 0.0
  %211 = vmatpush1.msra.mxu0 0.0
  %212 = vmatprep.subr.mxu0 0.0
  %213 = vmatpush1.msra.mxu0 0.0
  %214 = vmatprep.subr.mxu0 0.0
  %215 = vmatpush1.msra.mxu0 0.0
  %216 = vmatprep.subr.mxu0 0.0
  %217 = vmatpush1.msra.mxu0 0.0
  %218 = vmatprep.subr.mxu0 0.0
  %219 = vmatpush1.msra.mxu0 0.0
  %220 = vmatprep.subr.mxu0 0.0
  %221 = vmatpush1.msra.mxu0 0.0
  %222 = vmatprep.subr.mxu0 0.0
  %223 = vmatpush1.msra.mxu0 0.0
  %224 = vmatprep.subr.mxu0 0.0
  %225 = vmatpush1.msra.mxu0 0.0
  %226 = vmatprep.subr.mxu0 0.0
  %227 = vmatpush1.msra.mxu0 0.0
  %228 = vmatprep.subr.mxu0 0.0
  %229 = vmatpush1.msra.mxu0 0.0
  %230 = vmatprep.subr.mxu0 0.0
  %231 = vmatpush1.msra.mxu0 0.0
  %232 = vmatprep.mubr.f32.mxu0 0.0
  %233 = vmatmul.mubr.f32.gmra.mrb[0].mxu0 %v166
  %v234 = vpop.f32.mrb[0].mxu0
  %v235 = vadd.f32 %v55, %v234
  %v236 = vpop.f32.mrb[0].mxu0
  %237 = vdwg.mxu0
  %v238 = vxor.u32 %v235, 2147483648
  %v239 = vmul.f32 %v238, 1.442695
  %v240 = vpow.pop %v239
  %v241 = vadd.f32 %v240, 1.0
  %v242 = vrcp.pop %v241
  %v243 = vmul.f32 1.0, %v242
  %v244 = vadd.f32 %v243, %v148
  %v246 = vsel %vm69, %v244, 0
  %248 = vmatprep.subr.mxu0 0.0
  %249 = vmatpush1.msra.mxu0 %v39
  %250 = vmatprep.subr.mxu0 0.0
  %251 = vmatpush1.msra.mxu0 %v40
  %252 = vmatprep.subr.mxu0 0.0
  %253 = vmatpush1.msra.mxu0 %v41
  %254 = vmatprep.subr.mxu0 0.0
  %255 = vmatpush1.msra.mxu0 %v42
  %256 = vmatprep.subr.mxu0 0.0
  %257 = vmatpush1.msra.mxu0 0.0
  %258 = vmatprep.subr.mxu0 0.0
  %259 = vmatpush1.msra.mxu0 0.0
  %260 = vmatprep.subr.mxu0 0.0
  %261 = vmatpush1.msra.mxu0 0.0
  %262 = vmatprep.subr.mxu0 0.0
  %263 = vmatpush1.msra.mxu0 0.0
  %264 = vmatprep.subr.mxu0 0.0
  %265 = vmatpush1.msra.mxu0 0.0
  %266 = vmatprep.subr.mxu0 0.0
  %267 = vmatpush1.msra.mxu0 0.0
  %268 = vmatprep.subr.mxu0 0.0
  %269 = vmatpush1.msra.mxu0 0.0
  %270 = vmatprep.subr.mxu0 0.0
  %271 = vmatpush1.msra.mxu0 0.0
  %272 = vmatprep.subr.mxu0 0.0
  %273 = vmatpush1.msra.mxu0 0.0
  %274 = vmatprep.subr.mxu0 0.0
  %275 = vmatpush1.msra.mxu0 0.0
  %276 = vmatprep.subr.mxu0 0.0
  %277 = vmatpush1.msra.mxu0 0.0
  %278 = vmatprep.subr.mxu0 0.0
  %279 = vmatpush1.msra.mxu0 0.0
  %280 = vmatprep.subr.mxu0 0.0
  %281 = vmatpush1.msra.mxu0 0.0
  %282 = vmatprep.subr.mxu0 0.0
  %283 = vmatpush1.msra.mxu0 0.0
  %284 = vmatprep.subr.mxu0 0.0
  %285 = vmatpush1.msra.mxu0 0.0
  %286 = vmatprep.subr.mxu0 0.0
  %287 = vmatpush1.msra.mxu0 0.0
  %288 = vmatprep.subr.mxu0 0.0
  %289 = vmatpush1.msra.mxu0 0.0
  %290 = vmatprep.subr.mxu0 0.0
  %291 = vmatpush1.msra.mxu0 0.0
  %292 = vmatprep.subr.mxu0 0.0
  %293 = vmatpush1.msra.mxu0 0.0
  %294 = vmatprep.subr.mxu0 0.0
  %295 = vmatpush1.msra.mxu0 0.0
  %296 = vmatprep.subr.mxu0 0.0
  %297 = vmatpush1.msra.mxu0 0.0
  %298 = vmatprep.subr.mxu0 0.0
  %299 = vmatpush1.msra.mxu0 0.0
  %300 = vmatprep.subr.mxu0 0.0
  %301 = vmatpush1.msra.mxu0 0.0
  %302 = vmatprep.subr.mxu0 0.0
  %303 = vmatpush1.msra.mxu0 0.0
  %304 = vmatprep.subr.mxu0 0.0
  %305 = vmatpush1.msra.mxu0 0.0
  %306 = vmatprep.subr.mxu0 0.0
  %307 = vmatpush1.msra.mxu0 0.0
  %308 = vmatprep.subr.mxu0 0.0
  %309 = vmatpush1.msra.mxu0 0.0
  %310 = vmatprep.subr.mxu0 0.0
  %311 = vmatpush1.msra.mxu0 0.0
  %312 = vmatprep.mubr.f32.mxu0 0.0
  %313 = vmatmul.mubr.f32.gmra.mrb[0].mxu0 %v246
  %v314 = vpop.f32.mrb[0].mxu0
  %v315 = vadd.f32 %v62, %v314
  %v316 = vpop.f32.mrb[0].mxu0
  %317 = vdwg.mxu0
  %v318 = vxor.u32 %v315, 2147483648
  %v319 = vmul.f32 %v318, 1.442695
  %v320 = vpow.pop %v319
  %v321 = vadd.f32 %v320, 1.0
  %v322 = vrcp.pop %v321
  %v323 = vmul.f32 1.0, %v322
  %325 = vrot.lane.b32.xlu0 %v243, 96
  %v326 = vpop.permute.xlu0 %325
  %v328 = vadd.f32 %v323, %v326
  %v330 = vsel %vm69, %v328, 0
  %332 = vmatprep.subr.mxu0 0.0
  %333 = vmatpush1.msra.mxu0 %v27
  %334 = vmatprep.subr.mxu0 0.0
  %335 = vmatpush1.msra.mxu0 %v28
  %336 = vmatprep.subr.mxu0 0.0
  %337 = vmatpush1.msra.mxu0 %v29
  %338 = vmatprep.subr.mxu0 0.0
  %339 = vmatpush1.msra.mxu0 %v30
  %340 = vmatprep.subr.mxu0 0.0
  %341 = vmatpush1.msra.mxu0 0.0
  %342 = vmatprep.subr.mxu0 0.0
  %343 = vmatpush1.msra.mxu0 0.0
  %344 = vmatprep.subr.mxu0 0.0
  %345 = vmatpush1.msra.mxu0 0.0
  %346 = vmatprep.subr.mxu0 0.0
  %347 = vmatpush1.msra.mxu0 0.0
  %348 = vmatprep.subr.mxu0 0.0
  %349 = vmatpush1.msra.mxu0 0.0
  %350 = vmatprep.subr.mxu0 0.0
  %351 = vmatpush1.msra.mxu0 0.0
  %352 = vmatprep.subr.mxu0 0.0
  %353 = vmatpush1.msra.mxu0 0.0
  %354 = vmatprep.subr.mxu0 0.0
  %355 = vmatpush1.msra.mxu0 0.0
  %356 = vmatprep.subr.mxu0 0.0
  %357 = vmatpush1.msra.mxu0 0.0
  %358 = vmatprep.subr.mxu0 0.0
  %359 = vmatpush1.msra.mxu0 0.0
  %360 = vmatprep.subr.mxu0 0.0
  %361 = vmatpush1.msra.mxu0 0.0
  %362 = vmatprep.subr.mxu0 0.0
  %363 = vmatpush1.msra.mxu0 0.0
  %364 = vmatprep.subr.mxu0 0.0
  %365 = vmatpush1.msra.mxu0 0.0
  %366 = vmatprep.subr.mxu0 0.0
  %367 = vmatpush1.msra.mxu0 0.0
  %368 = vmatprep.subr.mxu0 0.0
  %369 = vmatpush1.msra.mxu0 0.0
  %370 = vmatprep.subr.mxu0 0.0
  %371 = vmatpush1.msra.mxu0 0.0
  %372 = vmatprep.subr.mxu0 0.0
  %373 = vmatpush1.msra.mxu0 0.0
  %374 = vmatprep.subr.mxu0 0.0
  %375 = vmatpush1.msra.mxu0 0.0
  %376 = vmatprep.subr.mxu0 0.0
  %377 = vmatpush1.msra.mxu0 0.0
  %378 = vmatprep.subr.mxu0 0.0
  %379 = vmatpush1.msra.mxu0 0.0
  %380 = vmatprep.subr.mxu0 0.0
  %381 = vmatpush1.msra.mxu0 0.0
  %382 = vmatprep.subr.mxu0 0.0
  %383 = vmatpush1.msra.mxu0 0.0
  %384 = vmatprep.subr.mxu0 0.0
  %385 = vmatpush1.msra.mxu0 0.0
  %386 = vmatprep.subr.mxu0 0.0
  %387 = vmatpush1.msra.mxu0 0.0
  %388 = vmatprep.subr.mxu0 0.0
  %389 = vmatpush1.msra.mxu0 0.0
  %390 = vmatprep.subr.mxu0 0.0
  %391 = vmatpush1.msra.mxu0 0.0
  %392 = vmatprep.subr.mxu0 0.0
  %393 = vmatpush1.msra.mxu0 0.0
  %394 = vmatprep.subr.mxu0 0.0
  %395 = vmatpush1.msra.mxu0 0.0
  %396 = vmatprep.mubr.f32.mxu0 0.0
  %397 = vmatmul.mubr.f32.gmra.mrb[0].mxu0 %v330
  %v398 = vpop.f32.mrb[0].mxu0
  %v399 = vadd.f32 %v48, %v398
  %v400 = vpop.f32.mrb[0].mxu0
  %401 = vdwg.mxu0
  %v402 = vxor.u32 %v399, 2147483648
  %v403 = vmul.f32 %v402, 1.442695
  %v404 = vpow.pop %v403
  %v405 = vadd.f32 %v404, 1.0
  %v406 = vrcp.pop %v405
  %v407 = vmul.f32 1.0, %v406
  %v408 = vadd.f32 %v243, %v407
  %v409 = vadd.f32 %v407, %v326
  %411 = vrot.lane.b32.xlu0 %v409, 32
  %v412 = vpop.permute.xlu0 %411
  %v414 = vsel %vm69, %v408, %v412
  %v416 = vsel %vm164, %v414, 0
  %418 = vmatprep.subr.mxu0 0.0
  %419 = vmatpush1.msra.mxu0 %v31
  %420 = vmatprep.subr.mxu0 0.0
  %421 = vmatpush1.msra.mxu0 %v32
  %422 = vmatprep.subr.mxu0 0.0
  %423 = vmatpush1.msra.mxu0 %v33
  %424 = vmatprep.subr.mxu0 0.0
  %425 = vmatpush1.msra.mxu0 %v34
  %426 = vmatprep.subr.mxu0 0.0
  %427 = vmatpush1.msra.mxu0 %v35
  %428 = vmatprep.subr.mxu0 0.0
  %429 = vmatpush1.msra.mxu0 %v36
  %430 = vmatprep.subr.mxu0 0.0
  %431 = vmatpush1.msra.mxu0 %v37
  %432 = vmatprep.subr.mxu0 0.0
  %433 = vmatpush1.msra.mxu0 %v38
  %434 = vmatprep.subr.mxu0 0.0
  %435 = vmatpush1.msra.mxu0 0.0
  %436 = vmatprep.subr.mxu0 0.0
  %437 = vmatpush1.msra.mxu0 0.0
  %438 = vmatprep.subr.mxu0 0.0
  %439 = vmatpush1.msra.mxu0 0.0
  %440 = vmatprep.subr.mxu0 0.0
  %441 = vmatpush1.msra.mxu0 0.0
  %442 = vmatprep.subr.mxu0 0.0
  %443 = vmatpush1.msra.mxu0 0.0
  %444 = vmatprep.subr.mxu0 0.0
  %445 = vmatpush1.msra.mxu0 0.0
  %446 = vmatprep.subr.mxu0 0.0
  %447 = vmatpush1.msra.mxu0 0.0
  %448 = vmatprep.subr.mxu0 0.0
  %449 = vmatpush1.msra.mxu0 0.0
  %450 = vmatprep.subr.mxu0 0.0
  %451 = vmatpush1.msra.mxu0 0.0
  %452 = vmatprep.subr.mxu0 0.0
  %453 = vmatpush1.msra.mxu0 0.0
  %454 = vmatprep.subr.mxu0 0.0
  %455 = vmatpush1.msra.mxu0 0.0
  %456 = vmatprep.subr.mxu0 0.0
  %457 = vmatpush1.msra.mxu0 0.0
  %458 = vmatprep.subr.mxu0 0.0
  %459 = vmatpush1.msra.mxu0 0.0
  %460 = vmatprep.subr.mxu0 0.0
  %461 = vmatpush1.msra.mxu0 0.0
  %462 = vmatprep.subr.mxu0 0.0
  %463 = vmatpush1.msra.mxu0 0.0
  %464 = vmatprep.subr.mxu0 0.0
  %465 = vmatpush1.msra.mxu0 0.0
  %466 = vmatprep.subr.mxu0 0.0
  %467 = vmatpush1.msra.mxu0 0.0
  %468 = vmatprep.subr.mxu0 0.0
  %469 = vmatpush1.msra.mxu0 0.0
  %470 = vmatprep.subr.mxu0 0.0
  %471 = vmatpush1.msra.mxu0 0.0
  %472 = vmatprep.subr.mxu0 0.0
  %473 = vmatpush1.msra.mxu0 0.0
  %474 = vmatprep.subr.mxu0 0.0
  %475 = vmatpush1.msra.mxu0 0.0
  %476 = vmatprep.subr.mxu0 0.0
  %477 = vmatpush1.msra.mxu0 0.0
  %478 = vmatprep.subr.mxu0 0.0
  %479 = vmatpush1.msra.mxu0 0.0
  %480 = vmatprep.subr.mxu0 0.0
  %481 = vmatpush1.msra.mxu0 0.0
  %482 = vmatprep.mubr.f32.mxu0 0.0
  %483 = vmatmul.mubr.f32.gmra.mrb[0].mxu0 %v416
  %v484 = vpop.f32.mrb[0].mxu0
  %v485 = vadd.f32 %v55, %v484
  %v486 = vpop.f32.mrb[0].mxu0
  %487 = vdwg.mxu0
  %v488 = vxor.u32 %v485, 2147483648
  %v489 = vmul.f32 %v488, 1.442695
  %v490 = vpow.pop %v489
  %v491 = vadd.f32 %v490, 1.0
  %v492 = vrcp.pop %v491
  %v493 = vmul.f32 1.0, %v492
  %v494 = vadd.f32 %v493, %v407
  %v496 = vsel %vm69, %v494, 0
  %498 = vmatprep.subr.mxu0 0.0
  %499 = vmatpush1.msra.mxu0 %v39
  %500 = vmatprep.subr.mxu0 0.0
  %501 = vmatpush1.msra.mxu0 %v40
  %502 = vmatprep.subr.mxu0 0.0
  %503 = vmatpush1.msra.mxu0 %v41
  %504 = vmatprep.subr.mxu0 0.0
  %505 = vmatpush1.msra.mxu0 %v42
  %506 = vmatprep.subr.mxu0 0.0
  %507 = vmatpush1.msra.mxu0 0.0
  %508 = vmatprep.subr.mxu0 0.0
  %509 = vmatpush1.msra.mxu0 0.0
  %510 = vmatprep.subr.mxu0 0.0
  %511 = vmatpush1.msra.mxu0 0.0
  %512 = vmatprep.subr.mxu0 0.0
  %513 = vmatpush1.msra.mxu0 0.0
  %514 = vmatprep.subr.mxu0 0.0
  %515 = vmatpush1.msra.mxu0 0.0
  %516 = vmatprep.subr.mxu0 0.0
  %517 = vmatpush1.msra.mxu0 0.0
  %518 = vmatprep.subr.mxu0 0.0
  %519 = vmatpush1.msra.mxu0 0.0
  %520 = vmatprep.subr.mxu0 0.0
  %521 = vmatpush1.msra.mxu0 0.0
  %522 = vmatprep.subr.mxu0 0.0
  %523 = vmatpush1.msra.mxu0 0.0
  %524 = vmatprep.subr.mxu0 0.0
  %525 = vmatpush1.msra.mxu0 0.0
  %526 = vmatprep.subr.mxu0 0.0
  %527 = vmatpush1.msra.mxu0 0.0
  %528 = vmatprep.subr.mxu0 0.0
  %529 = vmatpush1.msra.mxu0 0.0
  %530 = vmatprep.subr.mxu0 0.0
  %531 = vmatpush1.msra.mxu0 0.0
  %532 = vmatprep.subr.mxu0 0.0
  %533 = vmatpush1.msra.mxu0 0.0
  %534 = vmatprep.subr.mxu0 0.0
  %535 = vmatpush1.msra.mxu0 0.0
  %536 = vmatprep.subr.mxu0 0.0
  %537 = vmatpush1.msra.mxu0 0.0
  %538 = vmatprep.subr.mxu0 0.0
  %539 = vmatpush1.msra.mxu0 0.0
  %540 = vmatprep.subr.mxu0 0.0
  %541 = vmatpush1.msra.mxu0 0.0
  %542 = vmatprep.subr.mxu0 0.0
  %543 = vmatpush1.msra.mxu0 0.0
  %544 = vmatprep.subr.mxu0 0.0
  %545 = vmatpush1.msra.mxu0 0.0
  %546 = vmatprep.subr.mxu0 0.0
  %547 = vmatpush1.msra.mxu0 0.0
  %548 = vmatprep.subr.mxu0 0.0
  %549 = vmatpush1.msra.mxu0 0.0
  %550 = vmatprep.subr.mxu0 0.0
  %551 = vmatpush1.msra.mxu0 0.0
  %552 = vmatprep.subr.mxu0 0.0
  %553 = vmatpush1.msra.mxu0 0.0
  %554 = vmatprep.subr.mxu0 0.0
  %555 = vmatpush1.msra.mxu0 0.0
  %556 = vmatprep.subr.mxu0 0.0
  %557 = vmatpush1.msra.mxu0 0.0
  %558 = vmatprep.subr.mxu0 0.0
  %559 = vmatpush1.msra.mxu0 0.0
  %560 = vmatprep.subr.mxu0 0.0
  %561 = vmatpush1.msra.mxu0 0.0
  %562 = vmatprep.mubr.f32.mxu0 0.0
  %563 = vmatmul.mubr.f32.gmra.mrb[0].mxu0 %v496
  %v564 = vpop.f32.mrb[0].mxu0
  %v565 = vadd.f32 %v62, %v564
  %v566 = vpop.f32.mrb[0].mxu0
  %567 = vdwg.mxu0
  %v568 = vxor.u32 %v565, 2147483648
  %v569 = vmul.f32 %v568, 1.442695
  %v570 = vpow.pop %v569
  %v571 = vadd.f32 %v570, 1.0
  %v572 = vrcp.pop %v571
  %v573 = vmul.f32 1.0, %v572
  %575 = vrot.lane.b32.xlu0 %v493, 64
  %v576 = vpop.permute.xlu0 %575
  %v578 = vsel %vm69, %v573, %v493
  %v579 = vsel %vm164, %v578, %v576
  %vm580 = vcmask 785408
  %v581 = vsel %vm580, %v579, 0.0
  %582 = vst [vmem:[%s7] sm:$0xff] %v581
  // Predicated region
  $region30: #{interaction_forward.1} parent=0 // pred_check
    _
  $region31: #{interaction_forward.1} parent=0 // pred_check_branch
    %584 = sbr.rel (0) target = $region33
  $region32: #{interaction_forward.1} parent=0 // pred_region
    _
  $region33: #{interaction_forward.1} parent=0 // pred_fallthru
    _
  // Predicated region
  $region34: #{interaction_forward.1} parent=0 // pred_check
    _
  $region35: #{interaction_forward.1} parent=0 // pred_check_branch
    %586 = sbr.rel (0) target = $region37
  $region36: #{interaction_forward.1} parent=0 // pred_region
    _
  $region37: #{interaction_forward.1} parent=0 // pred_fallthru
    _

</llo_original>
